<compile_context>
chip_gen: v7x
topology: tpu7x:2x2x1
jax: 0.10.0
libtpu: 0.0.40
codegen_flags: <defaults>
</compile_context>

<pallas_src>
import math

import jax
import jax.numpy as jnp
from jax.experimental import pallas as pl
from jax.experimental.pallas import tpu as pltpu


def _round_up(x, m):
    return ((x + m - 1) // m) * m


def _lora_kernel(x_ref, wt_ref, b_ref, at_ref, bt_ref, o_ref, h_ref):
    # x_ref : (tm, D_in)    input rows (resident across the j loop)
    # wt_ref: (D_in, tn)    column tile of target Linear weight, transposed
    # b_ref : (1, tn)       column tile of target Linear bias
    # at_ref: (D_in, r_p)   lora_a weight, transposed (rank lane-padded)
    # bt_ref: (r_p, tn)     lora_b weight, transposed, pre-scaled by alpha/rank
    # o_ref : (tm, tn)      output tile
    # h_ref : (tm, r_p) f32 scratch holding x @ A^T for the current row tile
    j = pl.program_id(1)

    # The low-rank activation does not depend on the output-column tile:
    # compute it once per row tile and reuse it for every j.
    @pl.when(j == 0)
    def _():
        h_ref[...] = jnp.dot(x_ref[...], at_ref[...],
                             preferred_element_type=jnp.float32)

    # Base path: x @ W^T (f32 accumulation on the MXU, native-dtype inputs).
    base = jnp.dot(x_ref[...], wt_ref[...], preferred_element_type=jnp.float32)

    # LoRA path: h @ (B^T * alpha/rank)  -- scale already folded into bt.
    lora = jnp.dot(h_ref[...].astype(bt_ref.dtype), bt_ref[...],
                   preferred_element_type=jnp.float32)

    o_ref[...] = (base + b_ref[...].astype(jnp.float32) + lora).astype(o_ref.dtype)


def prepare_lora_weights(w, b, lora_a, lora_b, *, lora_alpha=32, lora_rank=16,
                         tn=512):
    """One-time weight prep (call outside the per-token forward path).

    w: (D_out, D_in); b: (D_out,); lora_a: (r, D_in); lora_b: (D_out, r).
    Transposes to lane-dense (in, out) layout, pads D_out / rank to 128-lane
    multiples, and folds the LoRA scale into B^T.
    """
    D_out, D_in = w.shape
    r = lora_a.shape[0]
    assert lora_b.shape == (D_out, r)
    assert lora_a.shape[1] == D_in

    # Output-lane padding: lane-dense stores want D_out a multiple of 128;
    # the column tile tn must divide the padded D_out.
    tn = min(tn, _round_up(D_out, 128))
    D_out_p = _round_up(D_out, tn)
    # Rank padding: keep the LoRA activation a full 128-lane slab.
    r_p = _round_up(r, 128)

    scale = float(lora_alpha) / float(lora_rank)

    wt = jnp.zeros((D_in, D_out_p), w.dtype).at[:, :D_out].set(w.T)
    b2d = jnp.zeros((1, D_out_p), b.dtype).at[:, :D_out].set(b[None, :])
    at = jnp.zeros((D_in, r_p), lora_a.dtype).at[:, :r].set(lora_a.T)
    # Padded rank rows of B^T stay zero, so padded lanes of h contribute 0.
    bt = jnp.zeros((r_p, D_out_p), lora_b.dtype).at[:r, :D_out].set(
        (lora_b.T * scale).astype(lora_b.dtype))

    return dict(wt=wt, b2d=b2d, at=at, bt=bt,
                D_in=D_in, D_out=D_out, D_out_p=D_out_p, r_p=r_p, tn=tn)


def lora_forward(x, params, *, tm=256, vmem_limit_bytes=None):
    """x: (B, S, D_in) -> (B, S, D_out); `params` from prepare_lora_weights."""
    B, S, D_in = x.shape
    assert D_in == params["D_in"]
    D_out, D_out_p = params["D_out"], params["D_out_p"]
    r_p, tn = params["r_p"], params["tn"]
    wt, b2d, at, bt = params["wt"], params["b2d"], params["at"], params["bt"]

    M = B * S
    # Large row tile to fill the MXU / amortize per-grid-step overhead, but
    # never larger than the (sublane-rounded) problem; keep multiple of 16.
    tm = min(tm, _round_up(M, 16))
    M_p = _round_up(M, tm)

    x2d = x.reshape(M, D_in)
    if M_p != M:
        x2d = jnp.pad(x2d, ((0, M_p - M), (0, 0)))

    grid = (M_p // tm, D_out_p // tn)

    if vmem_limit_bytes is None:
        isz = x.dtype.itemsize
        need = 2 * (tm * D_in * isz                       # x (double-buffered)
                    + D_in * tn * wt.dtype.itemsize       # W^T tile
                    + 8 * tn * b2d.dtype.itemsize         # bias tile (padded)
                    + D_in * r_p * at.dtype.itemsize      # A^T
                    + r_p * tn * bt.dtype.itemsize        # B^T tile
                    + tm * tn * isz)                      # out tile
        need += tm * r_p * 4                              # h scratch
        vmem_limit_bytes = int(min(max(2 * need, 32 * 2**20), 128 * 2**20))

    out2d = pl.pallas_call(
        _lora_kernel,
        out_shape=jax.ShapeDtypeStruct((M_p, D_out_p), x.dtype),
        grid_spec=pltpu.PrefetchScalarGridSpec(
            num_scalar_prefetch=0,
            grid=grid,
            in_specs=[
                pl.BlockSpec((tm, D_in), lambda i, j: (i, 0)),    # x rows
                pl.BlockSpec((D_in, tn), lambda i, j: (0, j)),    # W^T col tile
                pl.BlockSpec((1, tn), lambda i, j: (0, j)),       # bias tile
                pl.BlockSpec((D_in, r_p), lambda i, j: (0, 0)),   # A^T (const)
                pl.BlockSpec((r_p, tn), lambda i, j: (0, j)),     # scaled B^T
            ],
            out_specs=pl.BlockSpec((tm, tn), lambda i, j: (i, j)),
            scratch_shapes=[pltpu.VMEM((tm, r_p), jnp.float32)],
        ),
        compiler_params=pltpu.CompilerParams(
            # Rows shard across TensorCores (v7x megacore); j must stay
            # sequential because the h scratch is produced at j == 0.
            dimension_semantics=("parallel", "arbitrary"),
            vmem_limit_bytes=vmem_limit_bytes,
        ),
    )(x2d, wt, b2d, at, bt)

    return out2d[:M, :D_out].reshape(B, S, D_out)


if __name__ == "__main__":
    # Small deterministic setup consistent with the module:
    # target module = nn.Linear(in_features=32, out_features=32, bias=True)
    B, S = 2, 8
    D_in, D_out = 32, 32
    lora_rank, lora_alpha = 16, 32

    key = jax.random.PRNGKey(0)
    kx, kw, kb, ka, kbnz = jax.random.split(key, 5)

    x = jax.random.normal(kx, (B, S, D_in), dtype=jnp.float32)

    # Target Linear init (PyTorch default: U(-1/sqrt(in), 1/sqrt(in)))
    bound = 1.0 / math.sqrt(D_in)
    w = jax.random.uniform(kw, (D_out, D_in), jnp.float32, -bound, bound)
    b = jax.random.uniform(kb, (D_out,), jnp.float32, -bound, bound)

    # lora_a: kaiming_uniform_(a=sqrt(5)) -> U(-1/sqrt(fan_in), 1/sqrt(fan_in))
    lora_a = jax.random.uniform(ka, (lora_rank, D_in), jnp.float32, -bound, bound)
    # lora_b: zeros per the module's __init__
    lora_b = jnp.zeros((D_out, lora_rank), dtype=jnp.float32)

    scale = lora_alpha / lora_rank

    def reference(x, w, b, la, lb):
        return (x @ w.T + b) + ((x @ la.T) @ lb.T) * scale

    # Check 1: module-faithful init (lora_b == 0 -> LoRA path contributes 0).
    params = prepare_lora_weights(w, b, lora_a, lora_b,
                                  lora_alpha=lora_alpha, lora_rank=lora_rank)
    out = jax.block_until_ready(lora_forward(x, params))
    ref = reference(x, w, b, lora_a, lora_b)
    assert out.shape == (B, S, D_out)
    assert jnp.allclose(out, ref, atol=1e-4, rtol=1e-4), "mismatch (zero B)"

    # Check 2: nonzero adapter so the LoRA path is actually exercised.
    lora_b_nz = jax.random.uniform(kbnz, (D_out, lora_rank), jnp.float32,
                                   -bound, bound)
    params_nz = prepare_lora_weights(w, b, lora_a, lora_b_nz,
                                     lora_alpha=lora_alpha, lora_rank=lora_rank)
    out_nz = jax.block_until_ready(lora_forward(x, params_nz))
    ref_nz = reference(x, w, b, lora_a, lora_b_nz)
    assert jnp.allclose(out_nz, ref_nz, atol=1e-4, rtol=1e-4), "mismatch (LoRA)"

    print("KERNEL_OK")
</pallas_src>

<mosaic_0001>
module attributes {stable_mosaic.version = 11 : i64} {
  func.func @_lora_kernel(%arg0: i32, %arg1: i32, %arg2: memref<16x32xf32, #tpu.memory_space<vmem>>, %arg3: memref<32x128xf32, #tpu.memory_space<vmem>>, %arg4: memref<1x128xf32, #tpu.memory_space<vmem>>, %arg5: memref<32x128xf32, #tpu.memory_space<vmem>>, %arg6: memref<128x128xf32, #tpu.memory_space<vmem>>, %arg7: memref<16x128xf32, #tpu.memory_space<vmem>>, %arg8: memref<16x128xf32, #tpu.memory_space<vmem>>) attributes {dimension_semantics = [#tpu.dimension_semantics<parallel>, #tpu.dimension_semantics<arbitrary>], iteration_bounds = array<i64: 1, 1>, scalar_prefetch = 0 : i64, scratch_operands = 1 : i64, tpu.core_type = #tpu.core_type<tc>, window_params = [{transform_indices = @transform_0, window_bounds = array<i64: 16, 32>}, {transform_indices = @transform_1, window_bounds = array<i64: 32, 128>}, {transform_indices = @transform_2, window_bounds = array<i64: 1, 128>}, {pipeline_mode = #tpu.pipeline_mode<synchronous>, transform_indices = @transform_3, window_bounds = array<i64: 32, 128>}, {transform_indices = @transform_4, window_bounds = array<i64: 128, 128>}, {transform_indices = @transform_5, window_bounds = array<i64: 16, 128>}]} {
    %c0_i32 = arith.constant 0 : i32
    %0 = arith.cmpi eq, %arg1, %c0_i32 : i32
    %1 = arith.extui %0 : i1 to i32
    %c0_i32_0 = arith.constant 0 : i32
    %2 = arith.cmpi ne, %1, %c0_i32_0 : i32
    scf.if %2 {
      %c0_13 = arith.constant 0 : index
      %c0_14 = arith.constant 0 : index
      %14 = vector.load %arg2[%c0_13, %c0_14] : memref<16x32xf32, #tpu.memory_space<vmem>>, vector<16x32xf32>
      %c0_15 = arith.constant 0 : index
      %c0_16 = arith.constant 0 : index
      %15 = vector.load %arg5[%c0_15, %c0_16] : memref<32x128xf32, #tpu.memory_space<vmem>>, vector<32x128xf32>
      %cst_17 = arith.constant dense<0.000000e+00> : vector<16x128xf32>
      %16 = tpu.matmul %14, %15, %cst_17 {dimension_numbers = #tpu.dot_dimension_numbers<[1], [0], [0], [1], [0, 0, 1, 1], [], []>} : vector<16x32xf32>, vector<32x128xf32>, vector<16x128xf32> -> vector<16x128xf32>
      %c0_18 = arith.constant 0 : index
      %c0_19 = arith.constant 0 : index
      %17 = vector.load %arg8[%c0_18, %c0_19] : memref<16x128xf32, #tpu.memory_space<vmem>>, vector<16x128xf32>
      tpu.vector_store %arg8[%c0_18, %c0_19], %16 {strides = array<i32>} : memref<16x128xf32, #tpu.memory_space<vmem>>, vector<16x128xf32>,
    } else {
    }
    %c0 = arith.constant 0 : index
    %c0_1 = arith.constant 0 : index
    %3 = vector.load %arg2[%c0, %c0_1] : memref<16x32xf32, #tpu.memory_space<vmem>>, vector<16x32xf32>
    %c0_2 = arith.constant 0 : index
    %c0_3 = arith.constant 0 : index
    %4 = vector.load %arg3[%c0_2, %c0_3] : memref<32x128xf32, #tpu.memory_space<vmem>>, vector<32x128xf32>
    %cst = arith.constant dense<0.000000e+00> : vector<16x128xf32>
    %5 = tpu.matmul %3, %4, %cst {dimension_numbers = #tpu.dot_dimension_numbers<[1], [0], [0], [1], [0, 0, 1, 1], [], []>} : vector<16x32xf32>, vector<32x128xf32>, vector<16x128xf32> -> vector<16x128xf32>
    %c0_4 = arith.constant 0 : index
    %c0_5 = arith.constant 0 : index
    %6 = vector.load %arg8[%c0_4, %c0_5] : memref<16x128xf32, #tpu.memory_space<vmem>>, vector<16x128xf32>
    %c0_6 = arith.constant 0 : index
    %c0_7 = arith.constant 0 : index
    %7 = vector.load %arg6[%c0_6, %c0_7] : memref<128x128xf32, #tpu.memory_space<vmem>>, vector<128x128xf32>
    %cst_8 = arith.constant dense<0.000000e+00> : vector<16x128xf32>
    %8 = tpu.matmul %6, %7, %cst_8 {dimension_numbers = #tpu.dot_dimension_numbers<[1], [0], [0], [1], [0, 0, 1, 1], [], []>} : vector<16x128xf32>, vector<128x128xf32>, vector<16x128xf32> -> vector<16x128xf32>
    %c0_9 = arith.constant 0 : index
    %c0_10 = arith.constant 0 : index
    %9 = vector.load %arg4[%c0_9, %c0_10] : memref<1x128xf32, #tpu.memory_space<vmem>>, vector<1x128xf32>
    %10 = vector.broadcast %9 : vector<1x128xf32> to vector<16x128xf32>
    %11 = arith.addf %5, %10 : vector<16x128xf32>
    %12 = arith.addf %11, %8 : vector<16x128xf32>
    %c0_11 = arith.constant 0 : index
    %c0_12 = arith.constant 0 : index
    %13 = vector.load %arg7[%c0_11, %c0_12] : memref<16x128xf32, #tpu.memory_space<vmem>>, vector<16x128xf32>
    tpu.vector_store %arg7[%c0_11, %c0_12], %12 {strides = array<i32>} : memref<16x128xf32, #tpu.memory_space<vmem>>, vector<16x128xf32>,
    return
  }
  func.func @transform_0(%arg0: i32, %arg1: i32) -> (i32, i32) {
    %c0_i32 = arith.constant 0 : i32
    %c0_i32_0 = arith.constant 0 : i32
    return %arg0, %c0_i32 : i32, i32
  }
  func.func @transform_1(%arg0: i32, %arg1: i32) -> (i32, i32) {
    %c0_i32 = arith.constant 0 : i32
    %c0_i32_0 = arith.constant 0 : i32
    return %c0_i32, %arg1 : i32, i32
  }
  func.func @transform_2(%arg0: i32, %arg1: i32) -> (i32, i32) {
    %c0_i32 = arith.constant 0 : i32
    %c0_i32_0 = arith.constant 0 : i32
    return %c0_i32, %arg1 : i32, i32
  }
  func.func @transform_3(%arg0: i32, %arg1: i32) -> (i32, i32) {
    %c0_i32 = arith.constant 0 : i32
    %c0_i32_0 = arith.constant 0 : i32
    %c0_i32_1 = arith.constant 0 : i32
    return %c0_i32, %c0_i32_0 : i32, i32
  }
  func.func @transform_4(%arg0: i32, %arg1: i32) -> (i32, i32) {
    %c0_i32 = arith.constant 0 : i32
    %c0_i32_0 = arith.constant 0 : i32
    return %c0_i32, %arg1 : i32, i32
  }
  func.func @transform_5(%arg0: i32, %arg1: i32) -> (i32, i32) {
    %c0_i32 = arith.constant 0 : i32
    return %arg0, %arg1 : i32, i32
  }
}

</mosaic_0001>

<llo_original>
// kernel: tpu_custom_call.1
$region0: #{tpu_custom_call.1}
  #allocation0 [shape = 'u32[]', space=smem, size = 0x4, offset = 0x4, fixed_abs, tag = 'smem constant byte address 0x4 - core index']
  #allocation1 [shape = 'u32[144,128]{1,0:T(1,128)}', space=vmem, size = 0x12000, scoped, tag = 'internal scratch']
  #allocation2 [shape = 'f32[16,128]{1,0:T(8,128)}', space=vmem, size = 0x2000, scoped, tag = 'scratch operand']
  %s0 = inlined_call_operand.hbm [shape: f32[16,32], index: 0, kind: input, shape index: {}]
  %s1 = inlined_call_operand.hbm [shape: f32[32,128], index: 1, kind: input, shape index: {}]
  %s2 = inlined_call_operand.vmem [shape: f32[1,128], index: 2, kind: input, shape index: {}]
  %s3 = inlined_call_operand.hbm [shape: f32[32,128], index: 3, kind: input, shape index: {}]
  %s4 = inlined_call_operand.hbm [shape: f32[128,128], index: 4, kind: input, shape index: {}]
  %s5 = inlined_call_operand.hbm [shape: f32[16,128], index: 5, kind: output, shape index: {}]
  %s6 = sld [smem:[#allocation0]]
  $region50: #{tpu_custom_call.1} parent=0
    _
  %s8 = ssub.s32 1, %s6
  %s9 = scalar_select 0, %s8, %s6
  $region1: #{tpu_custom_call.1} parent=0
    #allocation3 [shape = 'u8[8192]{0}', space=vmem, size = 0x2000, scoped, tag = 'input window, operand 0, single buffered']
    #allocation4 [shape = 's32[1]{0}', space=sflag, size = 0x4, scoped, tag = 'scoped memory for tpu_custom_call.1']
    #allocation5 [shape = 's32[1]{0}', space=sflag, size = 0x4, scoped, tag = 'scoped memory for tpu_custom_call.1']
    #allocation6 [shape = 'u8[16384]{0}', space=vmem, size = 0x4000, scoped, tag = 'input window, operand 1, single buffered']
    #allocation7 [shape = 's32[1]{0}', space=sflag, size = 0x4, scoped, tag = 'scoped memory for tpu_custom_call.1']
    #allocation8 [shape = 'u8[16384]{0}', space=vmem, size = 0x4000, scoped, tag = 'input window, operand 3, single buffered']
    #allocation9 [shape = 'u8[65536]{0}', space=vmem, size = 0x10000, scoped, tag = 'input window, operand 4, single buffered']
    #allocation10 [shape = 's32[1]{0}', space=sflag, size = 0x4, scoped, tag = 'scoped memory for tpu_custom_call.1']
    #allocation11 [shape = 'u8[8192]{0}', space=vmem, size = 0x2000, scoped, tag = 'output window, operand 0, single buffered']
    %10 = vsyncpa [#allocation4], 0
    %11 = vsyncpa [#allocation7], 0
    %12 = vsyncpa [#allocation10], 0
    %13 = vsyncpa [#allocation5], 0
    // Predicated region
    $region2: #{tpu_custom_call.1} parent=1 // pred_check
      _
    $region3: #{tpu_custom_call.1} parent=1 // pred_check_branch
      %15 = sbr.rel (0) target = $region5
    $region4: #{tpu_custom_call.1} parent=1 // pred_region
      %s17 = ssub.s32 256, 256
      %18 = vsyncadd [#allocation4], %s17
      %s19 = sshll.u32 [#allocation3], 4
      %s20 = int_to_ptr.vmem [resolvable:$true] %s19
      %25 = dma.hbm_to_vmem [thread:$0]  %s0, 256, %s20, [#allocation4], 128, 128, 8
    $region5: #{tpu_custom_call.1} parent=1 // pred_fallthru
      _
    // Predicated region
    $region6: #{tpu_custom_call.1} parent=1 // pred_check
      _
    $region7: #{tpu_custom_call.1} parent=1 // pred_check_branch
      %27 = sbr.rel (0) target = $region9
    $region8: #{tpu_custom_call.1} parent=1 // pred_region
      %s29 = ssub.s32 512, 512
      %30 = vsyncadd [#allocation7], %s29
      %s31 = sshll.u32 [#allocation6], 4
      %s32 = int_to_ptr.vmem [resolvable:$true] %s31
      %37 = dma.hbm_to_vmem [thread:$0]  %s1, 512, %s32, [#allocation7], 128, 128, 8
    $region9: #{tpu_custom_call.1} parent=1 // pred_fallthru
      _
    // Predicated region
    $region10: #{tpu_custom_call.1} parent=1 // pred_check
      _
    $region11: #{tpu_custom_call.1} parent=1 // pred_check_branch
      %39 = sbr.rel (0) target = $region13
    $region12: #{tpu_custom_call.1} parent=1 // pred_region
      _
    $region13: #{tpu_custom_call.1} parent=1 // pred_fallthru
      _
    // Predicated region
    $region14: #{tpu_custom_call.1} parent=1 // pred_check
      _
    $region15: #{tpu_custom_call.1} parent=1 // pred_check_branch
      %41 = sbr.rel (0) target = $region17
    $region16: #{tpu_custom_call.1} parent=1 // pred_region
      %s43 = ssub.s32 512, 512
      %44 = vsyncadd [#allocation7], %s43
      %s45 = sshll.u32 [#allocation8], 4
      %s46 = int_to_ptr.vmem [resolvable:$true] %s45
      %51 = dma.hbm_to_vmem [thread:$0]  %s3, 512, %s46, [#allocation7], 128, 128, 8
    $region17: #{tpu_custom_call.1} parent=1 // pred_fallthru
      _
    // Predicated region
    $region18: #{tpu_custom_call.1} parent=1 // pred_check
      _
    $region19: #{tpu_custom_call.1} parent=1 // pred_check_branch
      %53 = sbr.rel (0) target = $region21
    $region20: #{tpu_custom_call.1} parent=1 // pred_region
      %s55 = ssub.s32 2048, 2048
      %56 = vsyncadd [#allocation10], %s55
      %s57 = sshll.u32 [#allocation9], 4
      %s58 = int_to_ptr.vmem [resolvable:$true] %s57
      %63 = dma.hbm_to_vmem [thread:$0]  %s4, 2048, %s58, [#allocation10], 128, 128, 8
    $region21: #{tpu_custom_call.1} parent=1 // pred_fallthru
      _
    // Predicated region
    $region22: #{tpu_custom_call.1} parent=1 // pred_check
      _
    $region23: #{tpu_custom_call.1} parent=1 // pred_check_branch
      %65 = sbr.rel (0) target = $region25
    $region24: #{tpu_custom_call.1} parent=1 // pred_region
      %66 = dma.done [#allocation4], 256
    $region25: #{tpu_custom_call.1} parent=1 // pred_fallthru
      _
    // Predicated region
    $region26: #{tpu_custom_call.1} parent=1 // pred_check
      _
    $region27: #{tpu_custom_call.1} parent=1 // pred_check_branch
      %68 = sbr.rel (0) target = $region29
    $region28: #{tpu_custom_call.1} parent=1 // pred_region
      %69 = dma.done [#allocation7], 512
    $region29: #{tpu_custom_call.1} parent=1 // pred_fallthru
      _
    // Predicated region
    $region30: #{tpu_custom_call.1} parent=1 // pred_check
      _
    $region31: #{tpu_custom_call.1} parent=1 // pred_check_branch
      %71 = sbr.rel (0) target = $region33
    $region32: #{tpu_custom_call.1} parent=1 // pred_region
      %72 = dma.done [#allocation7], 512
    $region33: #{tpu_custom_call.1} parent=1 // pred_fallthru
      _
    // Predicated region
    $region34: #{tpu_custom_call.1} parent=1 // pred_check
      _
    $region35: #{tpu_custom_call.1} parent=1 // pred_check_branch
      %74 = sbr.rel (0) target = $region37
    $region36: #{tpu_custom_call.1} parent=1 // pred_region
      %75 = dma.done [#allocation10], 2048
    $region37: #{tpu_custom_call.1} parent=1 // pred_fallthru
      _
    %p76 = scmp.eq.s32.totalorder 0, 0
    // Predicated region
    $region38: #{tpu_custom_call.1} parent=1 // pred_check
      %p77 = pneg %p76
    $region39: #{tpu_custom_call.1} parent=1 // pred_check_branch
      %79 = sbr.rel (%p77) target = $region41
    $region40: #{tpu_custom_call.1} parent=1 // pred_region
      %v80 = vld [vmem:[#allocation3] sm:$0xff]
      %v81 = vld [vmem:[#allocation3 + $0x8] sm:$0xff]
      %v82 = vld [vmem:[#allocation8] sm:$0xff]
      %v83 = vld [vmem:[#allocation8 + $0x8] sm:$0xff]
      %v84 = vld [vmem:[#allocation8 + $0x10] sm:$0xff]
      %v85 = vld [vmem:[#allocation8 + $0x18] sm:$0xff]
      %vm86 = vcmask 261120
      %v88 = vsel %vm86, %v80, 0
      %v91 = vsel %vm86, %v81, 0
      %93 = vmatprep.subr.mxu0 0.0
      %94 = vmatpush1.msra.mxu0 %v82
      %95 = vmatprep.subr.mxu0 0.0
      %96 = vmatpush1.msra.mxu0 %v83
      %97 = vmatprep.subr.mxu0 0.0
      %98 = vmatpush1.msra.mxu0 %v84
      %99 = vmatprep.subr.mxu0 0.0
      %100 = vmatpush1.msra.mxu0 %v85
      %101 = vmatprep.subr.mxu0 0.0
      %102 = vmatpush1.msra.mxu0 0.0
      %103 = vmatprep.subr.mxu0 0.0
      %104 = vmatpush1.msra.mxu0 0.0
      %105 = vmatprep.subr.mxu0 0.0
      %106 = vmatpush1.msra.mxu0 0.0
      %107 = vmatprep.subr.mxu0 0.0
      %108 = vmatpush1.msra.mxu0 0.0
      %109 = vmatprep.subr.mxu0 0.0
      %110 = vmatpush1.msra.mxu0 0.0
      %111 = vmatprep.subr.mxu0 0.0
      %112 = vmatpush1.msra.mxu0 0.0
      %113 = vmatprep.subr.mxu0 0.0
      %114 = vmatpush1.msra.mxu0 0.0
      %115 = vmatprep.subr.mxu0 0.0
      %116 = vmatpush1.msra.mxu0 0.0
      %117 = vmatprep.subr.mxu0 0.0
      %118 = vmatpush1.msra.mxu0 0.0
      %119 = vmatprep.subr.mxu0 0.0
      %120 = vmatpush1.msra.mxu0 0.0
      %121 = vmatprep.subr.mxu0 0.0
      %122 = vmatpush1.msra.mxu0 0.0
      %123 = vmatprep.subr.mxu0 0.0
      %124 = vmatpush1.msra.mxu0 0.0
      %125 = vmatprep.subr.mxu0 0.0
      %126 = vmatpush1.msra.mxu0 0.0
      %127 = vmatprep.subr.mxu0 0.0
      %128 = vmatpush1.msra.mxu0 0.0
      %129 = vmatprep.subr.mxu0 0.0
      %130 = vmatpush1.msra.mxu0 0.0
      %131 = vmatprep.subr.mxu0 0.0
      %132 = vmatpush1.msra.mxu0 0.0
      %133 = vmatprep.subr.mxu0 0.0
      %134 = vmatpush1.msra.mxu0 0.0
      %135 = vmatprep.subr.mxu0 0.0
      %136 = vmatpush1.msra.mxu0 0.0
      %137 = vmatprep.subr.mxu0 0.0
      %138 = vmatpush1.msra.mxu0 0.0
      %139 = vmatprep.subr.mxu0 0.0
      %140 = vmatpush1.msra.mxu0 0.0
      %141 = vmatprep.subr.mxu0 0.0
      %142 = vmatpush1.msra.mxu0 0.0
      %143 = vmatprep.subr.mxu0 0.0
      %144 = vmatpush1.msra.mxu0 0.0
      %145 = vmatprep.subr.mxu0 0.0
      %146 = vmatpush1.msra.mxu0 0.0
      %147 = vmatprep.subr.mxu0 0.0
      %148 = vmatpush1.msra.mxu0 0.0
      %149 = vmatprep.subr.mxu0 0.0
      %150 = vmatpush1.msra.mxu0 0.0
      %151 = vmatprep.subr.mxu0 0.0
      %152 = vmatpush1.msra.mxu0 0.0
      %153 = vmatprep.subr.mxu0 0.0
      %154 = vmatpush1.msra.mxu0 0.0
      %155 = vmatprep.subr.mxu0 0.0
      %156 = vmatpush1.msra.mxu0 0.0
      %157 = vmatprep.mubr.f32.mxu0 0.0
      %158 = vmatmul.mubr.f32.gmra.mrb[0].mxu0 %v88
      %v159 = vpop.f32.mrb[0].mxu0
      %v160 = vadd.f32 0.0, %v159
      %v161 = vpop.f32.mrb[0].mxu0
      %162 = vmatprep.mubr.f32.mxu0 0.0
      %163 = vmatmul.mubr.f32.gmra.mrb[0].mxu0 %v91
      %v164 = vpop.f32.mrb[0].mxu0
      %v165 = vadd.f32 0.0, %v164
      %v166 = vpop.f32.mrb[0].mxu0
      %167 = vdwg.mxu0
      %168 = vst [vmem:[#allocation2] sm:$0xff] %v160
      %169 = vst [vmem:[#allocation2 + $0x8] sm:$0xff] %v165
    $region41: #{tpu_custom_call.1} parent=1 // pred_fallthru
      _
    %v170 = vld [vmem:[#allocation3] sm:$0xff]
    %v171 = vld [vmem:[#allocation3 + $0x8] sm:$0xff]
    %v172 = vld [vmem:[#allocation6] sm:$0xff]
    %v173 = vld [vmem:[#allocation6 + $0x8] sm:$0xff]
    %v174 = vld [vmem:[#allocation6 + $0x10] sm:$0xff]
    %v175 = vld [vmem:[#allocation6 + $0x18] sm:$0xff]
    %v176 = vld [vmem:[#allocation2] sm:$0xff]
    %v177 = vld [vmem:[#allocation2 + $0x8] sm:$0xff]
    %v178 = vld [vmem:[#allocation9] sm:$0xff]
    %v179 = vld [vmem:[#allocation9 + $0x8] sm:$0xff]
    %v180 = vld [vmem:[#allocation9 + $0x10] sm:$0xff]
    %v181 = vld [vmem:[#allocation9 + $0x18] sm:$0xff]
    %v182 = vld [vmem:[#allocation9 + $0x20] sm:$0xff]
    %v183 = vld [vmem:[#allocation9 + $0x28] sm:$0xff]
    %v184 = vld [vmem:[#allocation9 + $0x30] sm:$0xff]
    %v185 = vld [vmem:[#allocation9 + $0x38] sm:$0xff]
    %v186 = vld [vmem:[#allocation9 + $0x40] sm:$0xff]
    %v187 = vld [vmem:[#allocation9 + $0x48] sm:$0xff]
    %v188 = vld [vmem:[#allocation9 + $0x50] sm:$0xff]
    %v189 = vld [vmem:[#allocation9 + $0x58] sm:$0xff]
    %v190 = vld [vmem:[#allocation9 + $0x60] sm:$0xff]
    %v191 = vld [vmem:[#allocation9 + $0x68] sm:$0xff]
    %v192 = vld [vmem:[#allocation9 + $0x70] sm:$0xff]
    %v193 = vld [vmem:[#allocation9 + $0x78] sm:$0xff]
    %194 = vmatprep.subr.mxu0 0.0
    %195 = vmatpush1.msra.mxu0 %v178
    %196 = vmatprep.subr.mxu0 0.0
    %197 = vmatpush1.msra.mxu0 %v179
    %198 = vmatprep.subr.mxu0 0.0
    %199 = vmatpush1.msra.mxu0 %v180
    %200 = vmatprep.subr.mxu0 0.0
    %201 = vmatpush1.msra.mxu0 %v181
    %202 = vmatprep.subr.mxu0 0.0
    %203 = vmatpush1.msra.mxu0 %v182
    %204 = vmatprep.subr.mxu0 0.0
    %205 = vmatpush1.msra.mxu0 %v183
    %206 = vmatprep.subr.mxu0 0.0
    %207 = vmatpush1.msra.mxu0 %v184
    %208 = vmatprep.subr.mxu0 0.0
    %209 = vmatpush1.msra.mxu0 %v185
    %210 = vmatprep.subr.mxu0 0.0
    %211 = vmatpush1.msra.mxu0 %v186
    %212 = vmatprep.subr.mxu0 0.0
    %213 = vmatpush1.msra.mxu0 %v187
    %214 = vmatprep.subr.mxu0 0.0
    %215 = vmatpush1.msra.mxu0 %v188
    %216 = vmatprep.subr.mxu0 0.0
    %217 = vmatpush1.msra.mxu0 %v189
    %218 = vmatprep.subr.mxu0 0.0
    %219 = vmatpush1.msra.mxu0 %v190
    %220 = vmatprep.subr.mxu0 0.0
    %221 = vmatpush1.msra.mxu0 %v191
    %222 = vmatprep.subr.mxu0 0.0
    %223 = vmatpush1.msra.mxu0 %v192
    %224 = vmatprep.subr.mxu0 0.0
    %225 = vmatpush1.msra.mxu0 %v193
    %226 = vmatprep.subr.mxu0 0.0
    %227 = vmatpush1.msra.mxu0 0.0
    %228 = vmatprep.subr.mxu0 0.0
    %229 = vmatpush1.msra.mxu0 0.0
    %230 = vmatprep.subr.mxu0 0.0
    %231 = vmatpush1.msra.mxu0 0.0
    %232 = vmatprep.subr.mxu0 0.0
    %233 = vmatpush1.msra.mxu0 0.0
    %234 = vmatprep.subr.mxu0 0.0
    %235 = vmatpush1.msra.mxu0 0.0
    %236 = vmatprep.subr.mxu0 0.0
    %237 = vmatpush1.msra.mxu0 0.0
    %238 = vmatprep.subr.mxu0 0.0
    %239 = vmatpush1.msra.mxu0 0.0
    %240 = vmatprep.subr.mxu0 0.0
    %241 = vmatpush1.msra.mxu0 0.0
    %242 = vmatprep.subr.mxu0 0.0
    %243 = vmatpush1.msra.mxu0 0.0
    %244 = vmatprep.subr.mxu0 0.0
    %245 = vmatpush1.msra.mxu0 0.0
    %246 = vmatprep.subr.mxu0 0.0
    %247 = vmatpush1.msra.mxu0 0.0
    %248 = vmatprep.subr.mxu0 0.0
    %249 = vmatpush1.msra.mxu0 0.0
    %250 = vmatprep.subr.mxu0 0.0
    %251 = vmatpush1.msra.mxu0 0.0
    %252 = vmatprep.subr.mxu0 0.0
    %253 = vmatpush1.msra.mxu0 0.0
    %254 = vmatprep.subr.mxu0 0.0
    %255 = vmatpush1.msra.mxu0 0.0
    %256 = vmatprep.subr.mxu0 0.0
    %257 = vmatpush1.msra.mxu0 0.0
    %258 = vmatprep.mubr.f32.mxu0 0.0
    %259 = vmatmul.mubr.f32.gmra.mrb[0].mxu0 %v176
    %v260 = vpop.f32.mrb[0].mxu0
    %v261 = vadd.f32 0.0, %v260
    %v262 = vpop.f32.mrb[0].mxu0
    %263 = vmatprep.mubr.f32.mxu0 0.0
    %264 = vmatmul.mubr.f32.gmra.mrb[0].mxu0 %v177
    %v265 = vpop.f32.mrb[0].mxu0
    %v266 = vadd.f32 0.0, %v265
    %v267 = vpop.f32.mrb[0].mxu0
    %268 = vdwg.mxu0
    %v269 = vld [vmem:[%s2] sm:$0x1]
    %v271 = vlaneseq
    %v272 = vshrl.u32 %v271, 7
    %v273 = vsub.s32 0, %v272
    %v274 = vrot.slane %v269, %v273
    %vm276 = vcmask 261120
    %v278 = vsel %vm276, %v170, 0
    %v281 = vsel %vm276, %v171, 0
    %283 = vmatprep.subr.mxu0 0.0
    %284 = vmatpush1.msra.mxu0 %v172
    %285 = vmatprep.subr.mxu0 0.0
    %286 = vmatpush1.msra.mxu0 %v173
    %287 = vmatprep.subr.mxu0 0.0
    %288 = vmatpush1.msra.mxu0 %v174
    %289 = vmatprep.subr.mxu0 0.0
    %290 = vmatpush1.msra.mxu0 %v175
    %291 = vmatprep.subr.mxu0 0.0
    %292 = vmatpush1.msra.mxu0 0.0
    %293 = vmatprep.subr.mxu0 0.0
    %294 = vmatpush1.msra.mxu0 0.0
    %295 = vmatprep.subr.mxu0 0.0
    %296 = vmatpush1.msra.mxu0 0.0
    %297 = vmatprep.subr.mxu0 0.0
    %298 = vmatpush1.msra.mxu0 0.0
    %299 = vmatprep.subr.mxu0 0.0
    %300 = vmatpush1.msra.mxu0 0.0
    %301 = vmatprep.subr.mxu0 0.0
    %302 = vmatpush1.msra.mxu0 0.0
    %303 = vmatprep.subr.mxu0 0.0
    %304 = vmatpush1.msra.mxu0 0.0
    %305 = vmatprep.subr.mxu0 0.0
    %306 = vmatpush1.msra.mxu0 0.0
    %307 = vmatprep.subr.mxu0 0.0
    %308 = vmatpush1.msra.mxu0 0.0
    %309 = vmatprep.subr.mxu0 0.0
    %310 = vmatpush1.msra.mxu0 0.0
    %311 = vmatprep.subr.mxu0 0.0
    %312 = vmatpush1.msra.mxu0 0.0
    %313 = vmatprep.subr.mxu0 0.0
    %314 = vmatpush1.msra.mxu0 0.0
    %315 = vmatprep.subr.mxu0 0.0
    %316 = vmatpush1.msra.mxu0 0.0
    %317 = vmatprep.subr.mxu0 0.0
    %318 = vmatpush1.msra.mxu0 0.0
    %319 = vmatprep.subr.mxu0 0.0
    %320 = vmatpush1.msra.mxu0 0.0
    %321 = vmatprep.subr.mxu0 0.0
    %322 = vmatpush1.msra.mxu0 0.0
    %323 = vmatprep.subr.mxu0 0.0
    %324 = vmatpush1.msra.mxu0 0.0
    %325 = vmatprep.subr.mxu0 0.0
    %326 = vmatpush1.msra.mxu0 0.0
    %327 = vmatprep.subr.mxu0 0.0
    %328 = vmatpush1.msra.mxu0 0.0
    %329 = vmatprep.subr.mxu0 0.0
    %330 = vmatpush1.msra.mxu0 0.0
    %331 = vmatprep.subr.mxu0 0.0
    %332 = vmatpush1.msra.mxu0 0.0
    %333 = vmatprep.subr.mxu0 0.0
    %334 = vmatpush1.msra.mxu0 0.0
    %335 = vmatprep.subr.mxu0 0.0
    %336 = vmatpush1.msra.mxu0 0.0
    %337 = vmatprep.subr.mxu0 0.0
    %338 = vmatpush1.msra.mxu0 0.0
    %339 = vmatprep.subr.mxu0 0.0
    %340 = vmatpush1.msra.mxu0 0.0
    %341 = vmatprep.subr.mxu0 0.0
    %342 = vmatpush1.msra.mxu0 0.0
    %343 = vmatprep.subr.mxu0 0.0
    %344 = vmatpush1.msra.mxu0 0.0
    %345 = vmatprep.subr.mxu0 0.0
    %346 = vmatpush1.msra.mxu0 0.0
    %347 = vmatprep.mubr.f32.mxu0 0.0
    %348 = vmatmul.mubr.f32.gmra.mrb[0].mxu0 %v278
    %v349 = vpop.f32.mrb[0].mxu0
    %v350 = vadd.f32 %v274, %v349
    %v351 = vpop.f32.mrb[0].mxu0
    %352 = vmatprep.mubr.f32.mxu0 0.0
    %353 = vmatmul.mubr.f32.gmra.mrb[0].mxu0 %v281
    %v354 = vpop.f32.mrb[0].mxu0
    %v355 = vadd.f32 %v274, %v354
    %v356 = vpop.f32.mrb[0].mxu0
    %357 = vdwg.mxu0
    %v358 = vadd.f32 %v350, %v261
    %v359 = vadd.f32 %v355, %v266
    %360 = vst [vmem:[#allocation11] sm:$0xff] %v358
    %361 = vst [vmem:[#allocation11 + $0x8] sm:$0xff] %v359
    // Predicated region
    $region42: #{tpu_custom_call.1} parent=1 // pred_check
      _
    $region43: #{tpu_custom_call.1} parent=1 // pred_check_branch
      %363 = sbr.rel (0) target = $region45
    $region44: #{tpu_custom_call.1} parent=1 // pred_region
      %s365 = ssub.s32 256, 256
      %366 = vsyncadd [#allocation5], %s365
      %s367 = sshll.u32 [#allocation11], 4
      %s368 = int_to_ptr.vmem [resolvable:$true] %s367
      %373 = dma.vmem_to_hbm [thread:$0]  %s368, 256, %s5, [#allocation5], 128, 128, 8
    $region45: #{tpu_custom_call.1} parent=1 // pred_fallthru
      _
    // Predicated region
    $region46: #{tpu_custom_call.1} parent=1 // pred_check
      _
    $region47: #{tpu_custom_call.1} parent=1 // pred_check_branch
      %375 = sbr.rel (0) target = $region49
    $region48: #{tpu_custom_call.1} parent=1 // pred_region
      %376 = dma.done [#allocation5], 256
    $region49: #{tpu_custom_call.1} parent=1 // pred_fallthru
      _
    %377 = vsyncpa [#allocation4], 1
    %378 = vsyncpa [#allocation7], 1
    %379 = vsyncpa [#allocation10], 1
    %380 = vsyncpa [#allocation5], 1

</llo_original>
